<compile_context>
chip_gen: v5e
topology: v5e:2x2
jax: 0.10.0
libtpu: 0.0.40
codegen_flags: <defaults>
</compile_context>

<pallas_src>
import functools

import jax
import jax.numpy as jnp
from jax.experimental import pallas as pl
from jax.experimental.pallas import tpu as pltpu

# ----- problem sizes (small, consistent with the module) -----
N_AGENTS = 4
OBS_SHAPE = 16
STATE_DIM = OBS_SHAPE * 2          # hypernet input
NUM_UNITS = 64                     # mixing hidden units
BATCH = 8

# Fused hypernet output layout: every segment occupies a 128-lane slot so all
# in-kernel slices start at 128-aligned lane offsets (no rotates).
SEG = 128
_W1_OFF = 0                        # agent a -> lanes [a*128, a*128+64)
_B1_OFF = N_AGENTS * SEG           # 512
_W2_OFF = _B1_OFF + SEG            # 640
_B2A_OFF = _W2_OFF + SEG           # 768
FUSED_OUT = _B2A_OFF + SEG         # 896  (= 7 * 128)


def _round_up(x, m):
    return (x + m - 1) // m * m


def _elu(x):
    # exact ELU (alpha=1); clamp the exp argument so the unselected branch
    # never produces inf.  exp goes to the EUP slot (free vs. VPU work).
    return jnp.where(x > 0, x, jnp.exp(jnp.minimum(x, 0.0)) - 1.0)


def mixing_kernel(q_ref, s_ref,
                  wcat_ref,   # (S, 896) fused [w1_a0..w1_a3 | b1 | w2 | b2a]
                  bcat_ref,   # (1, 896) fused biases (zeros in pad lanes)
                  w2b_ref,    # (1, 64)  hyper_b2 second-linear weight as a row
                  b2b_ref,    # (1, 1)   hyper_b2 second-linear bias
                  out_ref,
                  *, n_agents, num_units, seg):
    s = s_ref[...]                        # (tb, S)
    q = q_ref[...]                        # (tb, A)

    # One wide MXU pass for all four state-side hypernet linears.
    fused = (jnp.dot(s, wcat_ref[...], preferred_element_type=jnp.float32)
             + bcat_ref[...])             # (tb, 896)

    b1 = fused[:, _B1_OFF:_B1_OFF + num_units]                        # (tb, 64)
    w2 = jnp.abs(fused[:, _W2_OFF:_W2_OFF + num_units])               # (tb, 64)
    h2 = jnp.maximum(fused[:, _B2A_OFF:_B2A_OFF + num_units], 0.0)    # (tb, 64)

    # hidden = elu( bmm(q, w1) + b1 )  -- small static loop over agents (A=4).
    # Each agent's w1 slice starts at a 128-aligned lane offset.
    hidden = b1
    for a in range(n_agents):
        w1a = jnp.abs(fused[:, _W1_OFF + a * seg:_W1_OFF + a * seg + num_units])
        hidden = hidden + q[:, a:a + 1] * w1a
    hidden = _elu(hidden)                  # (tb, 64)

    # q_total = bmm(hidden, w2) + hyper_b2(state)
    # hyper_b2's second (64,1) linear is folded into the same lane reduction
    # instead of issuing a single-lane-output MXU matmul.
    q_tot = (jnp.sum(hidden * w2 + h2 * w2b_ref[...], axis=-1, keepdims=True)
             + b2b_ref[...])               # (tb, 1)
    out_ref[...] = q_tot.astype(out_ref.dtype)


def prepare_params(p):
    """Fuse the raw hypernet parameters wrapper-side (done once)."""
    wcat = jnp.zeros((STATE_DIM, FUSED_OUT), jnp.float32)
    bcat = jnp.zeros((1, FUSED_OUT), jnp.float32)

    # hyper_w1: agent a's 64 outputs go to lanes [a*128, a*128+64).
    for a in range(N_AGENTS):
        src = slice(a * NUM_UNITS, (a + 1) * NUM_UNITS)
        dst = slice(_W1_OFF + a * SEG, _W1_OFF + a * SEG + NUM_UNITS)
        wcat = wcat.at[:, dst].set(p["w1_w"][:, src])
        bcat = bcat.at[:, dst].set(p["w1_b"][:, src])

    wcat = wcat.at[:, _B1_OFF:_B1_OFF + NUM_UNITS].set(p["b1_w"])
    wcat = wcat.at[:, _W2_OFF:_W2_OFF + NUM_UNITS].set(p["w2_w"])
    wcat = wcat.at[:, _B2A_OFF:_B2A_OFF + NUM_UNITS].set(p["b2a_w"])

    bcat = bcat.at[:, _B1_OFF:_B1_OFF + NUM_UNITS].set(p["b1_b"])
    bcat = bcat.at[:, _W2_OFF:_W2_OFF + NUM_UNITS].set(p["w2_b"])
    bcat = bcat.at[:, _B2A_OFF:_B2A_OFF + NUM_UNITS].set(p["b2a_b"])

    return {
        "wcat": wcat,
        "bcat": bcat,
        "w2b_row": p["b2b_w"].reshape(1, NUM_UNITS),   # (64,1) -> (1,64)
        "b2b": p["b2b_b"].reshape(1, 1),
    }


def mixing_network_forward(q_values, state, fused_params, *, block_b=1024):
    """q_values: (B, n_agents) f32, state: (B, 2*obs_shape) f32 -> (B, 1) f32.

    Batch is tiled over a parallel grid axis; weights stay VMEM-resident
    (constant index_map) across all grid steps.
    """
    B = q_values.shape[0]
    block_b = _round_up(min(block_b, _round_up(B, 8)), 8)
    B_pad = _round_up(B, block_b)
    if B_pad != B:
        pad = B_pad - B
        q_values = jnp.pad(q_values, ((0, pad), (0, 0)))
        state = jnp.pad(state, ((0, pad), (0, 0)))
    grid = (B_pad // block_b,)

    kernel = functools.partial(mixing_kernel, n_agents=N_AGENTS,
                               num_units=NUM_UNITS, seg=SEG)

    out = pl.pallas_call(
        kernel,
        out_shape=jax.ShapeDtypeStruct((B_pad, 1), jnp.float32),
        grid_spec=pltpu.PrefetchScalarGridSpec(
            num_scalar_prefetch=0,
            grid=grid,
            in_specs=[
                pl.BlockSpec((block_b, N_AGENTS), lambda i: (i, 0)),
                pl.BlockSpec((block_b, STATE_DIM), lambda i: (i, 0)),
                pl.BlockSpec((STATE_DIM, FUSED_OUT), lambda i: (0, 0)),
                pl.BlockSpec((1, FUSED_OUT), lambda i: (0, 0)),
                pl.BlockSpec((1, NUM_UNITS), lambda i: (0, 0)),
                pl.BlockSpec((1, 1), lambda i: (0, 0)),
            ],
            out_specs=pl.BlockSpec((block_b, 1), lambda i: (i, 0)),
        ),
        compiler_params=pltpu.CompilerParams(
            dimension_semantics=("parallel",),   # shards across v7x's 2 TCs
        ),
    )(q_values, state, fused_params["wcat"], fused_params["bcat"],
      fused_params["w2b_row"], fused_params["b2b"])
    return out[:B]


def init_params(key):
    """Deterministic synthetic hypernet parameters (PyTorch Linear shapes,
    stored transposed as (in, out) so the kernel does state @ W)."""
    ks = jax.random.split(key, 12)
    s = 1.0 / jnp.sqrt(STATE_DIM)
    u = 1.0 / jnp.sqrt(NUM_UNITS)

    def U(k, shape, scale):
        return jax.random.uniform(k, shape, jnp.float32, -scale, scale)

    return {
        "w1_w": U(ks[0], (STATE_DIM, N_AGENTS * NUM_UNITS), s),
        "w1_b": U(ks[1], (1, N_AGENTS * NUM_UNITS), s),
        "b1_w": U(ks[2], (STATE_DIM, NUM_UNITS), s),
        "b1_b": U(ks[3], (1, NUM_UNITS), s),
        "w2_w": U(ks[4], (STATE_DIM, NUM_UNITS), s),
        "w2_b": U(ks[5], (1, NUM_UNITS), s),
        "b2a_w": U(ks[6], (STATE_DIM, NUM_UNITS), s),
        "b2a_b": U(ks[7], (1, NUM_UNITS), s),
        "b2b_w": U(ks[8], (NUM_UNITS, 1), u),
        "b2b_b": U(ks[9], (1, 1), u),
    }


def reference_forward(q_values, state, p):
    """Pure-JAX replica of the PyTorch forward for validation."""
    B = q_values.shape[0]
    q = q_values.reshape(-1, 1, N_AGENTS)
    w1 = jnp.abs(state @ p["w1_w"] + p["w1_b"]).reshape(-1, N_AGENTS, NUM_UNITS)
    b1 = (state @ p["b1_w"] + p["b1_b"]).reshape(-1, 1, NUM_UNITS)
    hidden = jax.nn.elu(jnp.einsum("bia,bau->biu", q, w1) + b1)
    w2 = jnp.abs(state @ p["w2_w"] + p["w2_b"]).reshape(-1, NUM_UNITS, 1)
    h2 = jax.nn.relu(state @ p["b2a_w"] + p["b2a_b"])
    b2 = (h2 @ p["b2b_w"] + p["b2b_b"]).reshape(-1, 1, 1)
    q_total = jnp.einsum("biu,buo->bio", hidden, w2) + b2
    return q_total.reshape(B, 1)


if __name__ == "__main__":
    key = jax.random.PRNGKey(0)
    kp, kq, ks = jax.random.split(key, 3)

    params = init_params(kp)
    fused = prepare_params(params)

    # Case 1: small single-block batch (matches the module's typical use).
    q_values = jax.random.normal(kq, (BATCH, N_AGENTS), jnp.float32)
    state = jax.random.normal(ks, (BATCH, STATE_DIM), jnp.float32)
    out = jax.block_until_ready(mixing_network_forward(q_values, state, fused))
    ref = reference_forward(q_values, state, params)
    assert out.shape == (BATCH, 1)
    assert jnp.allclose(out, ref, atol=1e-4, rtol=1e-4), (out, ref)

    # Case 2: exercise the batch-tiled grid + padding path (B=40, block=16 ->
    # padded to 48, grid=(3,)).
    kq2, ks2 = jax.random.split(jax.random.PRNGKey(1))
    B2 = 40
    q2 = jax.random.normal(kq2, (B2, N_AGENTS), jnp.float32)
    s2 = jax.random.normal(ks2, (B2, STATE_DIM), jnp.float32)
    out2 = jax.block_until_ready(
        mixing_network_forward(q2, s2, fused, block_b=16))
    ref2 = reference_forward(q2, s2, params)
    assert out2.shape == (B2, 1)
    assert jnp.allclose(out2, ref2, atol=1e-4, rtol=1e-4), (out2, ref2)

    print("KERNEL_OK")
</pallas_src>

<mosaic_0001>
module attributes {stable_mosaic.version = 11 : i64} {
  func.func @mixing_kernel(%arg0: i32, %arg1: memref<8x4xf32, #tpu.memory_space<vmem>>, %arg2: memref<8x32xf32, #tpu.memory_space<vmem>>, %arg3: memref<32x896xf32, #tpu.memory_space<vmem>>, %arg4: memref<1x896xf32, #tpu.memory_space<vmem>>, %arg5: memref<1x64xf32, #tpu.memory_space<vmem>>, %arg6: memref<1x1xf32, #tpu.memory_space<vmem>>, %arg7: memref<8x1xf32, #tpu.memory_space<vmem>>) attributes {dimension_semantics = [#tpu.dimension_semantics<parallel>], iteration_bounds = array<i64: 1>, scalar_prefetch = 0 : i64, scratch_operands = 0 : i64, tpu.core_type = #tpu.core_type<tc>, window_params = [{transform_indices = @transform_0, window_bounds = array<i64: 8, 4>}, {transform_indices = @transform_1, window_bounds = array<i64: 8, 32>}, {pipeline_mode = #tpu.pipeline_mode<synchronous>, transform_indices = @transform_2, window_bounds = array<i64: 32, 896>}, {pipeline_mode = #tpu.pipeline_mode<synchronous>, transform_indices = @transform_3, window_bounds = array<i64: 1, 896>}, {pipeline_mode = #tpu.pipeline_mode<synchronous>, transform_indices = @transform_4, window_bounds = array<i64: 1, 64>}, {pipeline_mode = #tpu.pipeline_mode<synchronous>, transform_indices = @transform_5, window_bounds = array<i64: 1, 1>}, {transform_indices = @transform_6, window_bounds = array<i64: 8, 1>}]} {
    %c0 = arith.constant 0 : index
    %c0_0 = arith.constant 0 : index
    %0 = vector.load %arg2[%c0, %c0_0] : memref<8x32xf32, #tpu.memory_space<vmem>>, vector<8x32xf32>
    %c0_1 = arith.constant 0 : index
    %c0_2 = arith.constant 0 : index
    %1 = vector.load %arg1[%c0_1, %c0_2] : memref<8x4xf32, #tpu.memory_space<vmem>>, vector<8x4xf32>
    %c0_3 = arith.constant 0 : index
    %c0_4 = arith.constant 0 : index
    %2 = vector.load %arg3[%c0_3, %c0_4] : memref<32x896xf32, #tpu.memory_space<vmem>>, vector<32x896xf32>
    %cst = arith.constant dense<0.000000e+00> : vector<8x896xf32>
    %3 = tpu.matmul %0, %2, %cst {dimension_numbers = #tpu.dot_dimension_numbers<[1], [0], [0], [1], [0, 0, 1, 1], [], []>} : vector<8x32xf32>, vector<32x896xf32>, vector<8x896xf32> -> vector<8x896xf32>
    %c0_5 = arith.constant 0 : index
    %c0_6 = arith.constant 0 : index
    %4 = vector.load %arg4[%c0_5, %c0_6] : memref<1x896xf32, #tpu.memory_space<vmem>>, vector<1x896xf32>
    %5 = vector.broadcast %4 : vector<1x896xf32> to vector<8x896xf32>
    %6 = arith.addf %3, %5 : vector<8x896xf32>
    %7 = vector.extract_strided_slice %6 {offsets = [0, 512], sizes = [8, 64], strides = [1, 1]} : vector<8x896xf32> to vector<8x64xf32>
    %8 = vector.extract_strided_slice %6 {offsets = [0, 640], sizes = [8, 64], strides = [1, 1]} : vector<8x896xf32> to vector<8x64xf32>
    %9 = math.absf %8 : vector<8x64xf32>
    %10 = vector.extract_strided_slice %6 {offsets = [0, 768], sizes = [8, 64], strides = [1, 1]} : vector<8x896xf32> to vector<8x64xf32>
    %cst_7 = arith.constant 0.000000e+00 : f32
    %11 = vector.broadcast %cst_7 : f32 to vector<8x64xf32>
    %12 = arith.maximumf %10, %11 : vector<8x64xf32>
    %13 = vector.extract_strided_slice %6 {offsets = [0, 0], sizes = [8, 64], strides = [1, 1]} : vector<8x896xf32> to vector<8x64xf32>
    %14 = math.absf %13 : vector<8x64xf32>
    %15 = vector.extract_strided_slice %1 {offsets = [0, 0], sizes = [8, 1], strides = [1, 1]} : vector<8x4xf32> to vector<8x1xf32>
    %16 = vector.broadcast %15 : vector<8x1xf32> to vector<8x64xf32>
    %17 = arith.mulf %16, %14 : vector<8x64xf32>
    %18 = arith.addf %7, %17 : vector<8x64xf32>
    %19 = vector.extract_strided_slice %6 {offsets = [0, 128], sizes = [8, 64], strides = [1, 1]} : vector<8x896xf32> to vector<8x64xf32>
    %20 = math.absf %19 : vector<8x64xf32>
    %21 = vector.extract_strided_slice %1 {offsets = [0, 1], sizes = [8, 1], strides = [1, 1]} : vector<8x4xf32> to vector<8x1xf32>
    %22 = vector.broadcast %21 : vector<8x1xf32> to vector<8x64xf32>
    %23 = arith.mulf %22, %20 : vector<8x64xf32>
    %24 = arith.addf %18, %23 : vector<8x64xf32>
    %25 = vector.extract_strided_slice %6 {offsets = [0, 256], sizes = [8, 64], strides = [1, 1]} : vector<8x896xf32> to vector<8x64xf32>
    %26 = math.absf %25 : vector<8x64xf32>
    %27 = vector.extract_strided_slice %1 {offsets = [0, 2], sizes = [8, 1], strides = [1, 1]} : vector<8x4xf32> to vector<8x1xf32>
    %28 = vector.broadcast %27 : vector<8x1xf32> to vector<8x64xf32>
    %29 = arith.mulf %28, %26 : vector<8x64xf32>
    %30 = arith.addf %24, %29 : vector<8x64xf32>
    %31 = vector.extract_strided_slice %6 {offsets = [0, 384], sizes = [8, 64], strides = [1, 1]} : vector<8x896xf32> to vector<8x64xf32>
    %32 = math.absf %31 : vector<8x64xf32>
    %33 = vector.extract_strided_slice %1 {offsets = [0, 3], sizes = [8, 1], strides = [1, 1]} : vector<8x4xf32> to vector<8x1xf32>
    %34 = vector.broadcast %33 : vector<8x1xf32> to vector<8x64xf32>
    %35 = arith.mulf %34, %32 : vector<8x64xf32>
    %36 = arith.addf %30, %35 : vector<8x64xf32>
    %cst_8 = arith.constant 0.000000e+00 : f32
    %37 = vector.broadcast %cst_8 : f32 to vector<8x64xf32>
    %38 = arith.cmpf ogt, %36, %37 : vector<8x64xf32>
    %cst_9 = arith.constant 0.000000e+00 : f32
    %39 = vector.broadcast %cst_9 : f32 to vector<8x64xf32>
    %40 = arith.minimumf %36, %39 : vector<8x64xf32>
    %41 = math.exp %40 : vector<8x64xf32>
    %cst_10 = arith.constant 1.000000e+00 : f32
    %42 = vector.broadcast %cst_10 : f32 to vector<8x64xf32>
    %43 = arith.subf %41, %42 : vector<8x64xf32>
    %44 = arith.select %38, %36, %43 : vector<8x64xi1>, vector<8x64xf32>
    %45 = arith.mulf %44, %9 : vector<8x64xf32>
    %c0_11 = arith.constant 0 : index
    %c0_12 = arith.constant 0 : index
    %46 = vector.load %arg5[%c0_11, %c0_12] : memref<1x64xf32, #tpu.memory_space<vmem>>, vector<1x64xf32>
    %47 = vector.broadcast %46 : vector<1x64xf32> to vector<8x64xf32>
    %48 = arith.mulf %12, %47 : vector<8x64xf32>
    %49 = arith.addf %45, %48 : vector<8x64xf32>
    %cst_13 = arith.constant dense<0.000000e+00> : vector<8xf32>
    %50 = vector.multi_reduction <add>, %49, %cst_13 [1] : vector<8x64xf32> to vector<8xf32>
    %51 = vector.shape_cast %50 : vector<8xf32> to vector<8x1xf32>
    %c0_14 = arith.constant 0 : index
    %c0_15 = arith.constant 0 : index
    %52 = vector.load %arg6[%c0_14, %c0_15] : memref<1x1xf32, #tpu.memory_space<vmem>>, vector<1x1xf32>
    %53 = vector.broadcast %52 : vector<1x1xf32> to vector<8x1xf32>
    %54 = arith.addf %51, %53 : vector<8x1xf32>
    %c0_16 = arith.constant 0 : index
    %c0_17 = arith.constant 0 : index
    %55 = vector.load %arg7[%c0_16, %c0_17] : memref<8x1xf32, #tpu.memory_space<vmem>>, vector<8x1xf32>
    tpu.vector_store %arg7[%c0_16, %c0_17], %54 {strides = array<i32>} : memref<8x1xf32, #tpu.memory_space<vmem>>, vector<8x1xf32>,
    return
  }
  func.func @transform_0(%arg0: i32) -> (i32, i32) {
    %c0_i32 = arith.constant 0 : i32
    %c0_i32_0 = arith.constant 0 : i32
    return %arg0, %c0_i32 : i32, i32
  }
  func.func @transform_1(%arg0: i32) -> (i32, i32) {
    %c0_i32 = arith.constant 0 : i32
    %c0_i32_0 = arith.constant 0 : i32
    return %arg0, %c0_i32 : i32, i32
  }
  func.func @transform_2(%arg0: i32) -> (i32, i32) {
    %c0_i32 = arith.constant 0 : i32
    %c0_i32_0 = arith.constant 0 : i32
    %c0_i32_1 = arith.constant 0 : i32
    return %c0_i32, %c0_i32_0 : i32, i32
  }
  func.func @transform_3(%arg0: i32) -> (i32, i32) {
    %c0_i32 = arith.constant 0 : i32
    %c0_i32_0 = arith.constant 0 : i32
    %c0_i32_1 = arith.constant 0 : i32
    return %c0_i32, %c0_i32_0 : i32, i32
  }
  func.func @transform_4(%arg0: i32) -> (i32, i32) {
    %c0_i32 = arith.constant 0 : i32
    %c0_i32_0 = arith.constant 0 : i32
    %c0_i32_1 = arith.constant 0 : i32
    return %c0_i32, %c0_i32_0 : i32, i32
  }
  func.func @transform_5(%arg0: i32) -> (i32, i32) {
    %c0_i32 = arith.constant 0 : i32
    %c0_i32_0 = arith.constant 0 : i32
    %c0_i32_1 = arith.constant 0 : i32
    return %c0_i32, %c0_i32_0 : i32, i32
  }
  func.func @transform_6(%arg0: i32) -> (i32, i32) {
    %c0_i32 = arith.constant 0 : i32
    %c0_i32_0 = arith.constant 0 : i32
    return %arg0, %c0_i32 : i32, i32
  }
}

</mosaic_0001>

<llo_original>
// kernel: tpu_custom_call.1
$region0: #{tpu_custom_call.1}
  #allocation0 [shape = 'u32[]', space=smem, size = 0x4, offset = 0x4, fixed_abs, tag = 'smem constant byte address 0x4 - core index']
  #allocation1 [shape = 'u32[72,128]{1,0:T(1,128)}', space=vmem, size = 0x9000, scoped, tag = 'internal scratch']
  #allocation2 [shape = 'f32[1,1]{1,0:T(1,128)S(1)}', space=vmem, size = 0x200, scoped, tag = 'scoped memory for tpu_custom_call.1']
  %s0 = inlined_call_operand.vmem [shape: f32[8,4], index: 0, kind: input, shape index: {}]
  %s1 = inlined_call_operand.vmem [shape: f32[8,32], index: 1, kind: input, shape index: {}]
  %s2 = inlined_call_operand.hbm [shape: f32[32,896], index: 2, kind: input, shape index: {}]
  %s3 = inlined_call_operand.vmem [shape: f32[1,896], index: 3, kind: input, shape index: {}]
  %s4 = inlined_call_operand.vmem [shape: f32[1,64], index: 4, kind: input, shape index: {}]
  %s5 = inlined_call_operand.<no memory space> [shape: f32[1,1], index: 5, kind: input, shape index: {}]
  %s6 = inlined_call_operand.vmem [shape: f32[8,1], index: 6, kind: output, shape index: {}]
  %s7 = sld [smem:[#allocation0]]
  $region38: #{tpu_custom_call.1} parent=0
    _
  %s9 = ssub.s32 1, %s7
  %s10 = scalar_select 0, %s9, %s7
  %v11 = vstv %s5
  %12 = vst [vmem:[#allocation2] sm:$0x1] %v11
  $region1: #{tpu_custom_call.1} parent=0
    #allocation3 [shape = 'u8[114688]{0}', space=vmem, size = 0x1c000, scoped, tag = 'input window, operand 2, single buffered']
    #allocation4 [shape = 's32[1]{0}', space=sflag, size = 0x4, scoped, tag = 'scoped memory for tpu_custom_call.1']
    %13 = vsyncpa [#allocation4], 0
    // Predicated region
    $region2: #{tpu_custom_call.1} parent=1 // pred_check
      _
    $region3: #{tpu_custom_call.1} parent=1 // pred_check_branch
      %15 = sbr.rel (0) target = $region5
    $region4: #{tpu_custom_call.1} parent=1 // pred_region
      _
    $region5: #{tpu_custom_call.1} parent=1 // pred_fallthru
      _
    // Predicated region
    $region6: #{tpu_custom_call.1} parent=1 // pred_check
      _
    $region7: #{tpu_custom_call.1} parent=1 // pred_check_branch
      %17 = sbr.rel (0) target = $region9
    $region8: #{tpu_custom_call.1} parent=1 // pred_region
      _
    $region9: #{tpu_custom_call.1} parent=1 // pred_fallthru
      _
    // Predicated region
    $region10: #{tpu_custom_call.1} parent=1 // pred_check
      _
    $region11: #{tpu_custom_call.1} parent=1 // pred_check_branch
      %19 = sbr.rel (0) target = $region13
    $region12: #{tpu_custom_call.1} parent=1 // pred_region
      %21 = vsyncadd [#allocation4], 0
      %s22 = sshll.u32 %s2, 4
      %s23 = int_to_ptr.hbm [resolvable:$true] %s22
      %s24 = sshll.u32 [#allocation3], 4
      %s25 = int_to_ptr.vmem [resolvable:$true] %s24
      %30 = dma.hbm_to_vmem [thread:$0]  %s23, 3584, %s25, [#allocation4], 896, 896, 56
    $region13: #{tpu_custom_call.1} parent=1 // pred_fallthru
      _
    // Predicated region
    $region14: #{tpu_custom_call.1} parent=1 // pred_check
      _
    $region15: #{tpu_custom_call.1} parent=1 // pred_check_branch
      %32 = sbr.rel (0) target = $region17
    $region16: #{tpu_custom_call.1} parent=1 // pred_region
      _
    $region17: #{tpu_custom_call.1} parent=1 // pred_fallthru
      _
    // Predicated region
    $region18: #{tpu_custom_call.1} parent=1 // pred_check
      _
    $region19: #{tpu_custom_call.1} parent=1 // pred_check_branch
      %34 = sbr.rel (0) target = $region21
    $region20: #{tpu_custom_call.1} parent=1 // pred_region
      _
    $region21: #{tpu_custom_call.1} parent=1 // pred_fallthru
      _
    // Predicated region
    $region22: #{tpu_custom_call.1} parent=1 // pred_check
      _
    $region23: #{tpu_custom_call.1} parent=1 // pred_check_branch
      %36 = sbr.rel (0) target = $region25
    $region24: #{tpu_custom_call.1} parent=1 // pred_region
      _
    $region25: #{tpu_custom_call.1} parent=1 // pred_fallthru
      _
    // Predicated region
    $region26: #{tpu_custom_call.1} parent=1 // pred_check
      _
    $region27: #{tpu_custom_call.1} parent=1 // pred_check_branch
      %38 = sbr.rel (0) target = $region29
    $region28: #{tpu_custom_call.1} parent=1 // pred_region
      %40 = dma.done [#allocation4], 3584
    $region29: #{tpu_custom_call.1} parent=1 // pred_fallthru
      _
    %v41 = vld [vmem:[%s1] sm:$0xff]
    %v42 = vld [vmem:[%s0] sm:$0xff]
    %v43 = vld [vmem:[#allocation3] sm:$0xff]
    %v44 = vld [vmem:[#allocation3 + $0x8] sm:$0xff]
    %v45 = vld [vmem:[#allocation3 + $0x10] sm:$0xff]
    %v46 = vld [vmem:[#allocation3 + $0x18] sm:$0xff]
    %v47 = vld [vmem:[#allocation3 + $0x20] sm:$0xff]
    %v48 = vld [vmem:[#allocation3 + $0x28] sm:$0xff]
    %v49 = vld [vmem:[#allocation3 + $0x30] sm:$0xff]
    %v50 = vld [vmem:[#allocation3 + $0x38] sm:$0xff]
    %v51 = vld [vmem:[#allocation3 + $0x40] sm:$0xff]
    %v52 = vld [vmem:[#allocation3 + $0x48] sm:$0xff]
    %v53 = vld [vmem:[#allocation3 + $0x50] sm:$0xff]
    %v54 = vld [vmem:[#allocation3 + $0x58] sm:$0xff]
    %v55 = vld [vmem:[#allocation3 + $0x60] sm:$0xff]
    %v56 = vld [vmem:[#allocation3 + $0x68] sm:$0xff]
    %v57 = vld [vmem:[#allocation3 + $0x70] sm:$0xff]
    %v58 = vld [vmem:[#allocation3 + $0x78] sm:$0xff]
    %v59 = vld [vmem:[#allocation3 + $0x80] sm:$0xff]
    %v60 = vld [vmem:[#allocation3 + $0x88] sm:$0xff]
    %v61 = vld [vmem:[#allocation3 + $0x90] sm:$0xff]
    %v62 = vld [vmem:[#allocation3 + $0x98] sm:$0xff]
    %v63 = vld [vmem:[#allocation3 + $0xa0] sm:$0xff]
    %v64 = vld [vmem:[#allocation3 + $0xa8] sm:$0xff]
    %v65 = vld [vmem:[#allocation3 + $0xb0] sm:$0xff]
    %v66 = vld [vmem:[#allocation3 + $0xb8] sm:$0xff]
    %v67 = vld [vmem:[#allocation3 + $0xc0] sm:$0xff]
    %v68 = vld [vmem:[#allocation3 + $0xc8] sm:$0xff]
    %v69 = vld [vmem:[#allocation3 + $0xd0] sm:$0xff]
    %v70 = vld [vmem:[#allocation3 + $0xd8] sm:$0xff]
    %v71 = vld [vmem:[%s3] sm:$0xff]
    %v73 = vperm.slane %v71, 0
    %v74 = vperm.slane %v71, 1
    %v75 = vperm.slane %v71, 2
    %v76 = vperm.slane %v71, 3
    %v77 = vperm.slane %v71, 4
    %v78 = vperm.slane %v71, 5
    %v79 = vperm.slane %v71, 6
    %vm87 = vcmask 261120
    %v89 = vsel %vm87, %v41, 0
    %91 = vmatpush.msra.mxu0 0.0
    %92 = vmatpush.msra.mxu0 0.0
    %93 = vmatpush.msra.mxu0 0.0
    %94 = vmatpush.msra.mxu0 0.0
    %95 = vmatpush.msra.mxu0 0.0
    %96 = vmatpush.msra.mxu0 0.0
    %97 = vmatpush.msra.mxu0 0.0
    %98 = vmatpush.msra.mxu0 0.0
    %99 = vmatpush.msra.mxu0 0.0
    %100 = vmatpush.msra.mxu0 0.0
    %101 = vmatpush.msra.mxu0 0.0
    %102 = vmatpush.msra.mxu0 0.0
    %103 = vmatpush.msra.mxu0 %v64
    %104 = vmatpush.msra.mxu0 %v57
    %105 = vmatpush.msra.mxu0 %v50
    %106 = vmatpush.msra.mxu0 %v43
    %107 = vmatmul.f32.gmra.mxu0 %v89
    %v108 = vpop.f32.mrf.mxu0
    %v109 = vadd.f32 %v73, %v108
    %110 = vdwg.mxu0
    %111 = vmatpush.msra.mxu0 0.0
    %112 = vmatpush.msra.mxu0 0.0
    %113 = vmatpush.msra.mxu0 0.0
    %114 = vmatpush.msra.mxu0 0.0
    %115 = vmatpush.msra.mxu0 0.0
    %116 = vmatpush.msra.mxu0 0.0
    %117 = vmatpush.msra.mxu0 0.0
    %118 = vmatpush.msra.mxu0 0.0
    %119 = vmatpush.msra.mxu0 0.0
    %120 = vmatpush.msra.mxu0 0.0
    %121 = vmatpush.msra.mxu0 0.0
    %122 = vmatpush.msra.mxu0 0.0
    %123 = vmatpush.msra.mxu0 %v65
    %124 = vmatpush.msra.mxu0 %v58
    %125 = vmatpush.msra.mxu0 %v51
    %126 = vmatpush.msra.mxu0 %v44
    %127 = vmatmul.f32.gmra.mxu0 %v89
    %v128 = vpop.f32.mrf.mxu0
    %v129 = vadd.f32 %v74, %v128
    %130 = vdwg.mxu0
    %131 = vmatpush.msra.mxu0 0.0
    %132 = vmatpush.msra.mxu0 0.0
    %133 = vmatpush.msra.mxu0 0.0
    %134 = vmatpush.msra.mxu0 0.0
    %135 = vmatpush.msra.mxu0 0.0
    %136 = vmatpush.msra.mxu0 0.0
    %137 = vmatpush.msra.mxu0 0.0
    %138 = vmatpush.msra.mxu0 0.0
    %139 = vmatpush.msra.mxu0 0.0
    %140 = vmatpush.msra.mxu0 0.0
    %141 = vmatpush.msra.mxu0 0.0
    %142 = vmatpush.msra.mxu0 0.0
    %143 = vmatpush.msra.mxu0 %v66
    %144 = vmatpush.msra.mxu0 %v59
    %145 = vmatpush.msra.mxu0 %v52
    %146 = vmatpush.msra.mxu0 %v45
    %147 = vmatmul.f32.gmra.mxu0 %v89
    %v148 = vpop.f32.mrf.mxu0
    %v149 = vadd.f32 %v75, %v148
    %150 = vdwg.mxu0
    %151 = vmatpush.msra.mxu0 0.0
    %152 = vmatpush.msra.mxu0 0.0
    %153 = vmatpush.msra.mxu0 0.0
    %154 = vmatpush.msra.mxu0 0.0
    %155 = vmatpush.msra.mxu0 0.0
    %156 = vmatpush.msra.mxu0 0.0
    %157 = vmatpush.msra.mxu0 0.0
    %158 = vmatpush.msra.mxu0 0.0
    %159 = vmatpush.msra.mxu0 0.0
    %160 = vmatpush.msra.mxu0 0.0
    %161 = vmatpush.msra.mxu0 0.0
    %162 = vmatpush.msra.mxu0 0.0
    %163 = vmatpush.msra.mxu0 %v67
    %164 = vmatpush.msra.mxu0 %v60
    %165 = vmatpush.msra.mxu0 %v53
    %166 = vmatpush.msra.mxu0 %v46
    %167 = vmatmul.f32.gmra.mxu0 %v89
    %v168 = vpop.f32.mrf.mxu0
    %v169 = vadd.f32 %v76, %v168
    %170 = vdwg.mxu0
    %171 = vmatpush.msra.mxu0 0.0
    %172 = vmatpush.msra.mxu0 0.0
    %173 = vmatpush.msra.mxu0 0.0
    %174 = vmatpush.msra.mxu0 0.0
    %175 = vmatpush.msra.mxu0 0.0
    %176 = vmatpush.msra.mxu0 0.0
    %177 = vmatpush.msra.mxu0 0.0
    %178 = vmatpush.msra.mxu0 0.0
    %179 = vmatpush.msra.mxu0 0.0
    %180 = vmatpush.msra.mxu0 0.0
    %181 = vmatpush.msra.mxu0 0.0
    %182 = vmatpush.msra.mxu0 0.0
    %183 = vmatpush.msra.mxu0 %v68
    %184 = vmatpush.msra.mxu0 %v61
    %185 = vmatpush.msra.mxu0 %v54
    %186 = vmatpush.msra.mxu0 %v47
    %187 = vmatmul.f32.gmra.mxu0 %v89
    %v188 = vpop.f32.mrf.mxu0
    %v189 = vadd.f32 %v77, %v188
    %190 = vdwg.mxu0
    %191 = vmatpush.msra.mxu0 0.0
    %192 = vmatpush.msra.mxu0 0.0
    %193 = vmatpush.msra.mxu0 0.0
    %194 = vmatpush.msra.mxu0 0.0
    %195 = vmatpush.msra.mxu0 0.0
    %196 = vmatpush.msra.mxu0 0.0
    %197 = vmatpush.msra.mxu0 0.0
    %198 = vmatpush.msra.mxu0 0.0
    %199 = vmatpush.msra.mxu0 0.0
    %200 = vmatpush.msra.mxu0 0.0
    %201 = vmatpush.msra.mxu0 0.0
    %202 = vmatpush.msra.mxu0 0.0
    %203 = vmatpush.msra.mxu0 %v69
    %204 = vmatpush.msra.mxu0 %v62
    %205 = vmatpush.msra.mxu0 %v55
    %206 = vmatpush.msra.mxu0 %v48
    %207 = vmatmul.f32.gmra.mxu0 %v89
    %v208 = vpop.f32.mrf.mxu0
    %v209 = vadd.f32 %v78, %v208
    %210 = vdwg.mxu0
    %211 = vmatpush.msra.mxu0 0.0
    %212 = vmatpush.msra.mxu0 0.0
    %213 = vmatpush.msra.mxu0 0.0
    %214 = vmatpush.msra.mxu0 0.0
    %215 = vmatpush.msra.mxu0 0.0
    %216 = vmatpush.msra.mxu0 0.0
    %217 = vmatpush.msra.mxu0 0.0
    %218 = vmatpush.msra.mxu0 0.0
    %219 = vmatpush.msra.mxu0 0.0
    %220 = vmatpush.msra.mxu0 0.0
    %221 = vmatpush.msra.mxu0 0.0
    %222 = vmatpush.msra.mxu0 0.0
    %223 = vmatpush.msra.mxu0 %v70
    %224 = vmatpush.msra.mxu0 %v63
    %225 = vmatpush.msra.mxu0 %v56
    %226 = vmatpush.msra.mxu0 %v49
    %227 = vmatmul.f32.gmra.mxu0 %v89
    %v228 = vpop.f32.mrf.mxu0
    %v229 = vadd.f32 %v79, %v228
    %230 = vdwg.mxu0
    %v231 = vand.u32 2147483647, %v209
    %v232 = vmax.f32 %v229, 0.0
    %v233 = vand.u32 2147483647, %v109
    %235 = vset.pattern.permute.xlu0 0
    %236 = vperm.xlu0 %235, %v42
    %v237 = vpop.permute.xlu0 %236
    %v239 = vmul.f32 %v237, %v233
    %v240 = vadd.f32 %v189, %v239
    %v241 = vand.u32 2147483647, %v129
    %242 = vset.pattern.permute.xlu0 1
    %243 = vperm.xlu0 %242, %v42
    %v244 = vpop.permute.xlu0 %243
    %v246 = vmul.f32 %v244, %v241
    %v247 = vadd.f32 %v240, %v246
    %v248 = vand.u32 2147483647, %v149
    %249 = vset.pattern.permute.xlu0 2
    %250 = vperm.xlu0 %249, %v42
    %v251 = vpop.permute.xlu0 %250
    %v253 = vmul.f32 %v251, %v248
    %v254 = vadd.f32 %v247, %v253
    %v255 = vand.u32 2147483647, %v169
    %256 = vset.pattern.permute.xlu0 3
    %257 = vperm.xlu0 %256, %v42
    %v258 = vpop.permute.xlu0 %257
    %v260 = vmul.f32 %v258, %v255
    %v261 = vadd.f32 %v254, %v260
    %vm262 = vcmp.gt.f32.partialorder %v261, 0.0
    %v263 = vmin.f32 %v261, 0.0
    %v264 = vmul.f32 %v263, 1.442695
    %v265 = vpow.pop %v264
    %v266 = vsub.f32 %v265, 1.0
    %v267 = vsel %vm262, %v261, %v266
    %v268 = vmul.f32 %v267, %v231
    %v269 = vld [vmem:[%s4] sm:$0x1]
    %v271 = vperm.slane %v269, 0
    %v273 = vmul.f32 %v232, %v271
    %v274 = vadd.f32 %v268, %v273
    %vm275 = vcmask 523264
    %v276 = vsel %vm275, %v274, 0.0
    %277 = vadd.xlane.f32.xlu0 %v276
    %v278 = vpop.xlane.xlu0 %277
    %v279 = vld [vmem:[#allocation2] sm:$0x1]
    %v281 = vperm.slane %v279, 0
    %v283 = vadd.f32 %v278, %v281
    %vm284 = vcmask 7168
    %285 = vst.msk [vmem:[%s6] sm:$0xff] %vm284, %v283
    // Predicated region
    $region30: #{tpu_custom_call.1} parent=1 // pred_check
      _
    $region31: #{tpu_custom_call.1} parent=1 // pred_check_branch
      %287 = sbr.rel (0) target = $region33
    $region32: #{tpu_custom_call.1} parent=1 // pred_region
      _
    $region33: #{tpu_custom_call.1} parent=1 // pred_fallthru
      _
    // Predicated region
    $region34: #{tpu_custom_call.1} parent=1 // pred_check
      _
    $region35: #{tpu_custom_call.1} parent=1 // pred_check_branch
      %289 = sbr.rel (0) target = $region37
    $region36: #{tpu_custom_call.1} parent=1 // pred_region
      _
    $region37: #{tpu_custom_call.1} parent=1 // pred_fallthru
      _
    %290 = vsyncpa [#allocation4], 1

</llo_original>
